<compile_context>
chip_gen: v5e
topology: v5e:2x2
jax: 0.10.0
libtpu: 0.0.40
codegen_flags: <defaults>
</compile_context>

<pallas_src>
import functools
import math

import jax
import jax.numpy as jnp
from jax.experimental import pallas as pl
from jax.experimental.pallas import tpu as pltpu


def _token_embedding_kernel(ids_ref, table_ref, out_ref, buf, sems, *, scale, tb):
    # ids_ref:   (n_pad,)    int32, SMEM (scalar prefetch)
    # table_ref: (V, D)      raw HBM ref (memory_space=pl.ANY)
    # out_ref:   (tb, D)     VMEM output tile
    # buf:       (2, tb, D)  VMEM gather double-buffer
    # sems:      (2,)        one DMA semaphore per buffer slot
    i = pl.program_id(0)

    def issue(block, slot):
        base = block * tb
        # One row-gather DMA per token; all tb copies are in flight at once and
        # signal the slot's semaphore. Ids come from SMEM, so each unrolled
        # iteration is just a scalar load + DMA-descriptor issue.
        for j in range(tb):
            tok = ids_ref[base + j]
            pltpu.make_async_copy(
                table_ref.at[pl.ds(tok, 1), :],
                buf.at[slot, pl.ds(j, 1), :],
                sems.at[slot],
            ).start()

    # Prime the pipeline with block 0 on the first grid step.
    @pl.when(i == 0)
    def _():
        issue(0, 0)

    # Prefetch the NEXT block into the other slot before waiting on this one,
    # hiding the gather latency behind this block's compute + write-back.
    @pl.when(i + 1 < pl.num_programs(0))
    def _():
        issue(i + 1, (i + 1) & 1)

    slot = i & 1
    # Aggregate wait: a (tb, D) descriptor's byte count equals the sum of the
    # tb row copies that signaled sems[slot]. (The source slice is only used
    # for its byte count; no data moves on a wait.)
    pltpu.make_async_copy(
        table_ref.at[pl.ds(0, tb), :],
        buf.at[slot],
        sems.at[slot],
    ).wait()

    # f32 scale fused into a single lane-dense (tb, D) store.
    out_ref[...] = (buf[slot].astype(jnp.float32) * scale).astype(out_ref.dtype)


def _round_up(x, m):
    return ((x + m - 1) // m) * m


def token_embedding(ids, emb_table, *, tb=128, max_tokens_per_call=32768):
    """ids: [B, S] int; emb_table: [V, D] float -> [B, S, D] (table dtype)."""
    B, S = ids.shape
    V, D = emb_table.shape
    N = B * S
    scale = float(math.sqrt(D))

    # Block size: multiple of 8 (sublane), no larger than the padded token
    # count, and no larger than the table's row count (keeps the aggregate
    # wait's dummy (tb, D) source slice in range).
    tb_eff = max(8, (int(tb) // 8) * 8)
    tb_eff = min(tb_eff, _round_up(N, 8))
    if V >= 8:
        tb_eff = min(tb_eff, (V // 8) * 8)

    n_pad = _round_up(N, tb_eff)

    # TODO(synk): PyTorch nn.Embedding raises on out-of-range ids; there is no
    # clean in-kernel error path on TPU, so clamp once here (vectorized).
    ids_flat = jnp.clip(ids.reshape(N).astype(jnp.int32), 0, V - 1)
    if n_pad != N:
        ids_flat = jnp.pad(ids_flat, (0, n_pad - N))  # pad with valid id 0

    kernel = functools.partial(_token_embedding_kernel, scale=scale, tb=tb_eff)

    def run(ids_chunk):
        num_blocks = ids_chunk.shape[0] // tb_eff
        return pl.pallas_call(
            kernel,
            out_shape=jax.ShapeDtypeStruct((ids_chunk.shape[0], D), emb_table.dtype),
            grid_spec=pltpu.PrefetchScalarGridSpec(
                num_scalar_prefetch=1,                   # ids -> SMEM
                grid=(num_blocks,),
                in_specs=[
                    # TODO(synk): on v5e/v6e a small table could be made
                    # VMEM-resident (constant index_map) to skip per-row DMAs;
                    # kept on the portable HBM-gather path (required on v7x).
                    pl.BlockSpec(memory_space=pl.ANY),   # table stays in HBM
                ],
                out_specs=pl.BlockSpec((tb_eff, D), lambda i, ids: (i, 0)),
                scratch_shapes=[
                    pltpu.VMEM((2, tb_eff, D), emb_table.dtype),  # gather double-buffer
                    pltpu.SemaphoreType.DMA((2,)),                # one sem per slot
                ],
            ),
            # Cross-step prefetch carries state between grid iterations, so the
            # token axis must stay sequential ("arbitrary").
            # TODO(synk): explicit 2-TC sharding on v7x would need per-core
            # pipeline priming via core_map, not plain "parallel".
            compiler_params=pltpu.CompilerParams(
                dimension_semantics=("arbitrary",),
            ),
        )(ids_chunk, emb_table)

    # Guard the SMEM footprint of the scalar-prefetched ids (a 1-D SMEM array
    # pads to next_pow2(4*N) bytes): chunk very long token streams.
    tokens_per_call = max(tb_eff, (max_tokens_per_call // tb_eff) * tb_eff)
    outs = [run(ids_flat[s:s + tokens_per_call])
            for s in range(0, n_pad, tokens_per_call)]
    out_flat = outs[0] if len(outs) == 1 else jnp.concatenate(outs, axis=0)

    return out_flat[:N].reshape(B, S, D)


if __name__ == "__main__":
    # Small shapes consistent with the module: batch=2, seq=8, vocab=64, d_model=128.
    B, S = 2, 8
    vocab_size, d_model = 64, 128

    key = jax.random.PRNGKey(0)
    k_emb, k_ids, k_ids2 = jax.random.split(key, 3)

    # nn.Embedding default init: N(0, 1).
    emb_table = jax.random.normal(k_emb, (vocab_size, d_model), dtype=jnp.float32)
    ids = jax.random.randint(k_ids, (B, S), minval=0, maxval=vocab_size,
                             dtype=jnp.int32)

    # tb=8 -> two grid blocks: exercises the cross-step double-buffered gather.
    out = jax.block_until_ready(token_embedding(ids, emb_table, tb=8))
    ref = jnp.take(emb_table, ids, axis=0) * math.sqrt(d_model)
    assert out.shape == (B, S, d_model)
    assert jnp.allclose(out, ref, atol=1e-5, rtol=1e-5), "mismatch vs reference"

    # Default block size with a ragged token count: exercises padding + slice.
    ids2 = jax.random.randint(k_ids2, (1, 5), minval=0, maxval=vocab_size,
                              dtype=jnp.int32)
    out2 = jax.block_until_ready(token_embedding(ids2, emb_table))
    ref2 = jnp.take(emb_table, ids2, axis=0) * math.sqrt(d_model)
    assert out2.shape == (1, 5, d_model)
    assert jnp.allclose(out2, ref2, atol=1e-5, rtol=1e-5), "mismatch vs reference (ragged)"

    print("KERNEL_OK")
</pallas_src>

<mosaic_0001>
module attributes {stable_mosaic.version = 11 : i64} {
  func.func @_token_embedding_kernel(%arg0: i32, %arg1: memref<16xi32, #tpu.memory_space<smem>>, %arg2: memref<64x128xf32, #tpu.memory_space<any>>, %arg3: memref<8x128xf32, #tpu.memory_space<vmem>>, %arg4: memref<2x8x128xf32, #tpu.memory_space<vmem>>, %arg5: memref<2x!tpu.dma_semaphore, #tpu.memory_space<semaphore_mem>>) attributes {dimension_semantics = [#tpu.dimension_semantics<arbitrary>], iteration_bounds = array<i64: 2>, scalar_prefetch = 1 : i64, scratch_operands = 2 : i64, tpu.core_type = #tpu.core_type<tc>, window_params = [{}, {transform_indices = @transform_1, window_bounds = array<i64: 8, 128>}]} {
    %c0_i32 = arith.constant 0 : i32
    %0 = arith.cmpi eq, %arg0, %c0_i32 : i32
    %1 = arith.extui %0 : i1 to i32
    %c0_i32_0 = arith.constant 0 : i32
    %2 = arith.cmpi ne, %1, %c0_i32_0 : i32
    scf.if %2 {
      %c0_10 = arith.constant 0 : index
      %19 = memref.load %arg1[%c0_10] : memref<16xi32, #tpu.memory_space<smem>>
      %c0_i32_11 = arith.constant 0 : i32
      %c0_i32_12 = arith.constant 0 : i32
      %c0_i32_13 = arith.constant 0 : i32
      %20 = tpu.memref_slice %arg2[%19, %c0_i32_13] : memref<64x128xf32, #tpu.memory_space<any>> -> memref<1x128xf32, #tpu.memory_space<any>>
      %c0_i32_14 = arith.constant 0 : i32
      %c0_i32_15 = arith.constant 0 : i32
      %21 = tpu.memref_slice %arg4[%c0_i32_11, %c0_i32_14, %c0_i32_15] : memref<2x8x128xf32, #tpu.memory_space<vmem>> -> memref<1x1x128xf32, #tpu.memory_space<vmem>>
      %22 = tpu.memref_squeeze %21 : memref<1x1x128xf32, #tpu.memory_space<vmem>> -> memref<1x128xf32, #tpu.memory_space<vmem>>
      %23 = tpu.memref_slice %arg5[%c0_i32_12] : memref<2x!tpu.dma_semaphore, #tpu.memory_space<semaphore_mem>> -> memref<1x!tpu.dma_semaphore, #tpu.memory_space<semaphore_mem>>
      %24 = tpu.memref_squeeze %23 : memref<1x!tpu.dma_semaphore, #tpu.memory_space<semaphore_mem>> -> memref<!tpu.dma_semaphore, #tpu.memory_space<semaphore_mem>>
      tpu.enqueue_dma source(%20 : memref<1x128xf32, #tpu.memory_space<any>>) target(%22 : memref<1x128xf32, #tpu.memory_space<vmem>>) target_semaphore(%24 : memref<!tpu.dma_semaphore, #tpu.memory_space<semaphore_mem>>)
      %c1 = arith.constant 1 : index
      %25 = memref.load %arg1[%c1] : memref<16xi32, #tpu.memory_space<smem>>
      %c0_i32_16 = arith.constant 0 : i32
      %c0_i32_17 = arith.constant 0 : i32
      %c0_i32_18 = arith.constant 0 : i32
      %26 = tpu.memref_slice %arg2[%25, %c0_i32_18] : memref<64x128xf32, #tpu.memory_space<any>> -> memref<1x128xf32, #tpu.memory_space<any>>
      %c1_i32_19 = arith.constant 1 : i32
      %c0_i32_20 = arith.constant 0 : i32
      %27 = tpu.memref_slice %arg4[%c0_i32_16, %c1_i32_19, %c0_i32_20] : memref<2x8x128xf32, #tpu.memory_space<vmem>> -> memref<1x1x128xf32, #tpu.memory_space<vmem>>
      %28 = tpu.memref_squeeze %27 : memref<1x1x128xf32, #tpu.memory_space<vmem>> -> memref<1x128xf32, #tpu.memory_space<vmem>>
      %29 = tpu.memref_slice %arg5[%c0_i32_17] : memref<2x!tpu.dma_semaphore, #tpu.memory_space<semaphore_mem>> -> memref<1x!tpu.dma_semaphore, #tpu.memory_space<semaphore_mem>>
      %30 = tpu.memref_squeeze %29 : memref<1x!tpu.dma_semaphore, #tpu.memory_space<semaphore_mem>> -> memref<!tpu.dma_semaphore, #tpu.memory_space<semaphore_mem>>
      tpu.enqueue_dma source(%26 : memref<1x128xf32, #tpu.memory_space<any>>) target(%28 : memref<1x128xf32, #tpu.memory_space<vmem>>) target_semaphore(%30 : memref<!tpu.dma_semaphore, #tpu.memory_space<semaphore_mem>>)
      %c2 = arith.constant 2 : index
      %31 = memref.load %arg1[%c2] : memref<16xi32, #tpu.memory_space<smem>>
      %c0_i32_21 = arith.constant 0 : i32
      %c0_i32_22 = arith.constant 0 : i32
      %c0_i32_23 = arith.constant 0 : i32
      %32 = tpu.memref_slice %arg2[%31, %c0_i32_23] : memref<64x128xf32, #tpu.memory_space<any>> -> memref<1x128xf32, #tpu.memory_space<any>>
      %c2_i32_24 = arith.constant 2 : i32
      %c0_i32_25 = arith.constant 0 : i32
      %33 = tpu.memref_slice %arg4[%c0_i32_21, %c2_i32_24, %c0_i32_25] : memref<2x8x128xf32, #tpu.memory_space<vmem>> -> memref<1x1x128xf32, #tpu.memory_space<vmem>>
      %34 = tpu.memref_squeeze %33 : memref<1x1x128xf32, #tpu.memory_space<vmem>> -> memref<1x128xf32, #tpu.memory_space<vmem>>
      %35 = tpu.memref_slice %arg5[%c0_i32_22] : memref<2x!tpu.dma_semaphore, #tpu.memory_space<semaphore_mem>> -> memref<1x!tpu.dma_semaphore, #tpu.memory_space<semaphore_mem>>
      %36 = tpu.memref_squeeze %35 : memref<1x!tpu.dma_semaphore, #tpu.memory_space<semaphore_mem>> -> memref<!tpu.dma_semaphore, #tpu.memory_space<semaphore_mem>>
      tpu.enqueue_dma source(%32 : memref<1x128xf32, #tpu.memory_space<any>>) target(%34 : memref<1x128xf32, #tpu.memory_space<vmem>>) target_semaphore(%36 : memref<!tpu.dma_semaphore, #tpu.memory_space<semaphore_mem>>)
      %c3 = arith.constant 3 : index
      %37 = memref.load %arg1[%c3] : memref<16xi32, #tpu.memory_space<smem>>
      %c0_i32_26 = arith.constant 0 : i32
      %c0_i32_27 = arith.constant 0 : i32
      %c0_i32_28 = arith.constant 0 : i32
      %38 = tpu.memref_slice %arg2[%37, %c0_i32_28] : memref<64x128xf32, #tpu.memory_space<any>> -> memref<1x128xf32, #tpu.memory_space<any>>
      %c3_i32 = arith.constant 3 : i32
      %c0_i32_29 = arith.constant 0 : i32
      %39 = tpu.memref_slice %arg4[%c0_i32_26, %c3_i32, %c0_i32_29] : memref<2x8x128xf32, #tpu.memory_space<vmem>> -> memref<1x1x128xf32, #tpu.memory_space<vmem>>
      %40 = tpu.memref_squeeze %39 : memref<1x1x128xf32, #tpu.memory_space<vmem>> -> memref<1x128xf32, #tpu.memory_space<vmem>>
      %41 = tpu.memref_slice %arg5[%c0_i32_27] : memref<2x!tpu.dma_semaphore, #tpu.memory_space<semaphore_mem>> -> memref<1x!tpu.dma_semaphore, #tpu.memory_space<semaphore_mem>>
      %42 = tpu.memref_squeeze %41 : memref<1x!tpu.dma_semaphore, #tpu.memory_space<semaphore_mem>> -> memref<!tpu.dma_semaphore, #tpu.memory_space<semaphore_mem>>
      tpu.enqueue_dma source(%38 : memref<1x128xf32, #tpu.memory_space<any>>) target(%40 : memref<1x128xf32, #tpu.memory_space<vmem>>) target_semaphore(%42 : memref<!tpu.dma_semaphore, #tpu.memory_space<semaphore_mem>>)
      %c4 = arith.constant 4 : index
      %43 = memref.load %arg1[%c4] : memref<16xi32, #tpu.memory_space<smem>>
      %c0_i32_30 = arith.constant 0 : i32
      %c0_i32_31 = arith.constant 0 : i32
      %c0_i32_32 = arith.constant 0 : i32
      %44 = tpu.memref_slice %arg2[%43, %c0_i32_32] : memref<64x128xf32, #tpu.memory_space<any>> -> memref<1x128xf32, #tpu.memory_space<any>>
      %c4_i32 = arith.constant 4 : i32
      %c0_i32_33 = arith.constant 0 : i32
      %45 = tpu.memref_slice %arg4[%c0_i32_30, %c4_i32, %c0_i32_33] : memref<2x8x128xf32, #tpu.memory_space<vmem>> -> memref<1x1x128xf32, #tpu.memory_space<vmem>>
      %46 = tpu.memref_squeeze %45 : memref<1x1x128xf32, #tpu.memory_space<vmem>> -> memref<1x128xf32, #tpu.memory_space<vmem>>
      %47 = tpu.memref_slice %arg5[%c0_i32_31] : memref<2x!tpu.dma_semaphore, #tpu.memory_space<semaphore_mem>> -> memref<1x!tpu.dma_semaphore, #tpu.memory_space<semaphore_mem>>
      %48 = tpu.memref_squeeze %47 : memref<1x!tpu.dma_semaphore, #tpu.memory_space<semaphore_mem>> -> memref<!tpu.dma_semaphore, #tpu.memory_space<semaphore_mem>>
      tpu.enqueue_dma source(%44 : memref<1x128xf32, #tpu.memory_space<any>>) target(%46 : memref<1x128xf32, #tpu.memory_space<vmem>>) target_semaphore(%48 : memref<!tpu.dma_semaphore, #tpu.memory_space<semaphore_mem>>)
      %c5 = arith.constant 5 : index
      %49 = memref.load %arg1[%c5] : memref<16xi32, #tpu.memory_space<smem>>
      %c0_i32_34 = arith.constant 0 : i32
      %c0_i32_35 = arith.constant 0 : i32
      %c0_i32_36 = arith.constant 0 : i32
      %50 = tpu.memref_slice %arg2[%49, %c0_i32_36] : memref<64x128xf32, #tpu.memory_space<any>> -> memref<1x128xf32, #tpu.memory_space<any>>
      %c5_i32 = arith.constant 5 : i32
      %c0_i32_37 = arith.constant 0 : i32
      %51 = tpu.memref_slice %arg4[%c0_i32_34, %c5_i32, %c0_i32_37] : memref<2x8x128xf32, #tpu.memory_space<vmem>> -> memref<1x1x128xf32, #tpu.memory_space<vmem>>
      %52 = tpu.memref_squeeze %51 : memref<1x1x128xf32, #tpu.memory_space<vmem>> -> memref<1x128xf32, #tpu.memory_space<vmem>>
      %53 = tpu.memref_slice %arg5[%c0_i32_35] : memref<2x!tpu.dma_semaphore, #tpu.memory_space<semaphore_mem>> -> memref<1x!tpu.dma_semaphore, #tpu.memory_space<semaphore_mem>>
      %54 = tpu.memref_squeeze %53 : memref<1x!tpu.dma_semaphore, #tpu.memory_space<semaphore_mem>> -> memref<!tpu.dma_semaphore, #tpu.memory_space<semaphore_mem>>
      tpu.enqueue_dma source(%50 : memref<1x128xf32, #tpu.memory_space<any>>) target(%52 : memref<1x128xf32, #tpu.memory_space<vmem>>) target_semaphore(%54 : memref<!tpu.dma_semaphore, #tpu.memory_space<semaphore_mem>>)
      %c6 = arith.constant 6 : index
      %55 = memref.load %arg1[%c6] : memref<16xi32, #tpu.memory_space<smem>>
      %c0_i32_38 = arith.constant 0 : i32
      %c0_i32_39 = arith.constant 0 : i32
      %c0_i32_40 = arith.constant 0 : i32
      %56 = tpu.memref_slice %arg2[%55, %c0_i32_40] : memref<64x128xf32, #tpu.memory_space<any>> -> memref<1x128xf32, #tpu.memory_space<any>>
      %c6_i32 = arith.constant 6 : i32
      %c0_i32_41 = arith.constant 0 : i32
      %57 = tpu.memref_slice %arg4[%c0_i32_38, %c6_i32, %c0_i32_41] : memref<2x8x128xf32, #tpu.memory_space<vmem>> -> memref<1x1x128xf32, #tpu.memory_space<vmem>>
      %58 = tpu.memref_squeeze %57 : memref<1x1x128xf32, #tpu.memory_space<vmem>> -> memref<1x128xf32, #tpu.memory_space<vmem>>
      %59 = tpu.memref_slice %arg5[%c0_i32_39] : memref<2x!tpu.dma_semaphore, #tpu.memory_space<semaphore_mem>> -> memref<1x!tpu.dma_semaphore, #tpu.memory_space<semaphore_mem>>
      %60 = tpu.memref_squeeze %59 : memref<1x!tpu.dma_semaphore, #tpu.memory_space<semaphore_mem>> -> memref<!tpu.dma_semaphore, #tpu.memory_space<semaphore_mem>>
      tpu.enqueue_dma source(%56 : memref<1x128xf32, #tpu.memory_space<any>>) target(%58 : memref<1x128xf32, #tpu.memory_space<vmem>>) target_semaphore(%60 : memref<!tpu.dma_semaphore, #tpu.memory_space<semaphore_mem>>)
      %c7 = arith.constant 7 : index
      %61 = memref.load %arg1[%c7] : memref<16xi32, #tpu.memory_space<smem>>
      %c0_i32_42 = arith.constant 0 : i32
      %c0_i32_43 = arith.constant 0 : i32
      %c0_i32_44 = arith.constant 0 : i32
      %62 = tpu.memref_slice %arg2[%61, %c0_i32_44] : memref<64x128xf32, #tpu.memory_space<any>> -> memref<1x128xf32, #tpu.memory_space<any>>
      %c7_i32 = arith.constant 7 : i32
      %c0_i32_45 = arith.constant 0 : i32
      %63 = tpu.memref_slice %arg4[%c0_i32_42, %c7_i32, %c0_i32_45] : memref<2x8x128xf32, #tpu.memory_space<vmem>> -> memref<1x1x128xf32, #tpu.memory_space<vmem>>
      %64 = tpu.memref_squeeze %63 : memref<1x1x128xf32, #tpu.memory_space<vmem>> -> memref<1x128xf32, #tpu.memory_space<vmem>>
      %65 = tpu.memref_slice %arg5[%c0_i32_43] : memref<2x!tpu.dma_semaphore, #tpu.memory_space<semaphore_mem>> -> memref<1x!tpu.dma_semaphore, #tpu.memory_space<semaphore_mem>>
      %66 = tpu.memref_squeeze %65 : memref<1x!tpu.dma_semaphore, #tpu.memory_space<semaphore_mem>> -> memref<!tpu.dma_semaphore, #tpu.memory_space<semaphore_mem>>
      tpu.enqueue_dma source(%62 : memref<1x128xf32, #tpu.memory_space<any>>) target(%64 : memref<1x128xf32, #tpu.memory_space<vmem>>) target_semaphore(%66 : memref<!tpu.dma_semaphore, #tpu.memory_space<semaphore_mem>>)
    } else {
    }
    %c1_i32 = arith.constant 1 : i32
    %3 = arith.addi %arg0, %c1_i32 : i32
    %c2_i32 = arith.constant 2 : i32
    %4 = arith.cmpi slt, %3, %c2_i32 : i32
    %5 = arith.extui %4 : i1 to i32
    %c0_i32_1 = arith.constant 0 : i32
    %6 = arith.cmpi ne, %5, %c0_i32_1 : i32
    scf.if %6 {
      %c1_i32_10 = arith.constant 1 : i32
      %19 = arith.addi %arg0, %c1_i32_10 : i32
      %c1_i32_11 = arith.constant 1 : i32
      %20 = arith.addi %arg0, %c1_i32_11 : i32
      %c1_i32_12 = arith.constant 1 : i32
      %21 = arith.andi %20, %c1_i32_12 : i32
      %c8_i32 = arith.constant 8 : i32
      %22 = arith.muli %19, %c8_i32 : i32
      %c0_i32_13 = arith.constant 0 : i32
      %23 = arith.addi %22, %c0_i32_13 : i32
      %24 = arith.index_cast %23 : i32 to index
      %25 = memref.load %arg1[%24] : memref<16xi32, #tpu.memory_space<smem>>
      %c0_i32_14 = arith.constant 0 : i32
      %26 = tpu.memref_slice %arg2[%25, %c0_i32_14] : memref<64x128xf32, #tpu.memory_space<any>> -> memref<1x128xf32, #tpu.memory_space<any>>
      %c0_i32_15 = arith.constant 0 : i32
      %c0_i32_16 = arith.constant 0 : i32
      %27 = tpu.memref_slice %arg4[%21, %c0_i32_15, %c0_i32_16] : memref<2x8x128xf32, #tpu.memory_space<vmem>> -> memref<1x1x128xf32, #tpu.memory_space<vmem>>
      %28 = tpu.memref_squeeze %27 : memref<1x1x128xf32, #tpu.memory_space<vmem>> -> memref<1x128xf32, #tpu.memory_space<vmem>>
      %29 = tpu.memref_slice %arg5[%21] : memref<2x!tpu.dma_semaphore, #tpu.memory_space<semaphore_mem>> -> memref<1x!tpu.dma_semaphore, #tpu.memory_space<semaphore_mem>>
      %30 = tpu.memref_squeeze %29 : memref<1x!tpu.dma_semaphore, #tpu.memory_space<semaphore_mem>> -> memref<!tpu.dma_semaphore, #tpu.memory_space<semaphore_mem>>
      tpu.enqueue_dma source(%26 : memref<1x128xf32, #tpu.memory_space<any>>) target(%28 : memref<1x128xf32, #tpu.memory_space<vmem>>) target_semaphore(%30 : memref<!tpu.dma_semaphore, #tpu.memory_space<semaphore_mem>>)
      %c1_i32_17 = arith.constant 1 : i32
      %31 = arith.addi %22, %c1_i32_17 : i32
      %32 = arith.index_cast %31 : i32 to index
      %33 = memref.load %arg1[%32] : memref<16xi32, #tpu.memory_space<smem>>
      %c0_i32_18 = arith.constant 0 : i32
      %34 = tpu.memref_slice %arg2[%33, %c0_i32_18] : memref<64x128xf32, #tpu.memory_space<any>> -> memref<1x128xf32, #tpu.memory_space<any>>
      %c1_i32_19 = arith.constant 1 : i32
      %c0_i32_20 = arith.constant 0 : i32
      %35 = tpu.memref_slice %arg4[%21, %c1_i32_19, %c0_i32_20] : memref<2x8x128xf32, #tpu.memory_space<vmem>> -> memref<1x1x128xf32, #tpu.memory_space<vmem>>
      %36 = tpu.memref_squeeze %35 : memref<1x1x128xf32, #tpu.memory_space<vmem>> -> memref<1x128xf32, #tpu.memory_space<vmem>>
      %37 = tpu.memref_slice %arg5[%21] : memref<2x!tpu.dma_semaphore, #tpu.memory_space<semaphore_mem>> -> memref<1x!tpu.dma_semaphore, #tpu.memory_space<semaphore_mem>>
      %38 = tpu.memref_squeeze %37 : memref<1x!tpu.dma_semaphore, #tpu.memory_space<semaphore_mem>> -> memref<!tpu.dma_semaphore, #tpu.memory_space<semaphore_mem>>
      tpu.enqueue_dma source(%34 : memref<1x128xf32, #tpu.memory_space<any>>) target(%36 : memref<1x128xf32, #tpu.memory_space<vmem>>) target_semaphore(%38 : memref<!tpu.dma_semaphore, #tpu.memory_space<semaphore_mem>>)
      %c2_i32_21 = arith.constant 2 : i32
      %39 = arith.addi %22, %c2_i32_21 : i32
      %40 = arith.index_cast %39 : i32 to index
      %41 = memref.load %arg1[%40] : memref<16xi32, #tpu.memory_space<smem>>
      %c0_i32_22 = arith.constant 0 : i32
      %42 = tpu.memref_slice %arg2[%41, %c0_i32_22] : memref<64x128xf32, #tpu.memory_space<any>> -> memref<1x128xf32, #tpu.memory_space<any>>
      %c2_i32_23 = arith.constant 2 : i32
      %c0_i32_24 = arith.constant 0 : i32
      %43 = tpu.memref_slice %arg4[%21, %c2_i32_23, %c0_i32_24] : memref<2x8x128xf32, #tpu.memory_space<vmem>> -> memref<1x1x128xf32, #tpu.memory_space<vmem>>
      %44 = tpu.memref_squeeze %43 : memref<1x1x128xf32, #tpu.memory_space<vmem>> -> memref<1x128xf32, #tpu.memory_space<vmem>>
      %45 = tpu.memref_slice %arg5[%21] : memref<2x!tpu.dma_semaphore, #tpu.memory_space<semaphore_mem>> -> memref<1x!tpu.dma_semaphore, #tpu.memory_space<semaphore_mem>>
      %46 = tpu.memref_squeeze %45 : memref<1x!tpu.dma_semaphore, #tpu.memory_space<semaphore_mem>> -> memref<!tpu.dma_semaphore, #tpu.memory_space<semaphore_mem>>
      tpu.enqueue_dma source(%42 : memref<1x128xf32, #tpu.memory_space<any>>) target(%44 : memref<1x128xf32, #tpu.memory_space<vmem>>) target_semaphore(%46 : memref<!tpu.dma_semaphore, #tpu.memory_space<semaphore_mem>>)
      %c3_i32 = arith.constant 3 : i32
      %47 = arith.addi %22, %c3_i32 : i32
      %48 = arith.index_cast %47 : i32 to index
      %49 = memref.load %arg1[%48] : memref<16xi32, #tpu.memory_space<smem>>
      %c0_i32_25 = arith.constant 0 : i32
      %50 = tpu.memref_slice %arg2[%49, %c0_i32_25] : memref<64x128xf32, #tpu.memory_space<any>> -> memref<1x128xf32, #tpu.memory_space<any>>
      %c3_i32_26 = arith.constant 3 : i32
      %c0_i32_27 = arith.constant 0 : i32
      %51 = tpu.memref_slice %arg4[%21, %c3_i32_26, %c0_i32_27] : memref<2x8x128xf32, #tpu.memory_space<vmem>> -> memref<1x1x128xf32, #tpu.memory_space<vmem>>
      %52 = tpu.memref_squeeze %51 : memref<1x1x128xf32, #tpu.memory_space<vmem>> -> memref<1x128xf32, #tpu.memory_space<vmem>>
      %53 = tpu.memref_slice %arg5[%21] : memref<2x!tpu.dma_semaphore, #tpu.memory_space<semaphore_mem>> -> memref<1x!tpu.dma_semaphore, #tpu.memory_space<semaphore_mem>>
      %54 = tpu.memref_squeeze %53 : memref<1x!tpu.dma_semaphore, #tpu.memory_space<semaphore_mem>> -> memref<!tpu.dma_semaphore, #tpu.memory_space<semaphore_mem>>
      tpu.enqueue_dma source(%50 : memref<1x128xf32, #tpu.memory_space<any>>) target(%52 : memref<1x128xf32, #tpu.memory_space<vmem>>) target_semaphore(%54 : memref<!tpu.dma_semaphore, #tpu.memory_space<semaphore_mem>>)
      %c4_i32 = arith.constant 4 : i32
      %55 = arith.addi %22, %c4_i32 : i32
      %56 = arith.index_cast %55 : i32 to index
      %57 = memref.load %arg1[%56] : memref<16xi32, #tpu.memory_space<smem>>
      %c0_i32_28 = arith.constant 0 : i32
      %58 = tpu.memref_slice %arg2[%57, %c0_i32_28] : memref<64x128xf32, #tpu.memory_space<any>> -> memref<1x128xf32, #tpu.memory_space<any>>
      %c4_i32_29 = arith.constant 4 : i32
      %c0_i32_30 = arith.constant 0 : i32
      %59 = tpu.memref_slice %arg4[%21, %c4_i32_29, %c0_i32_30] : memref<2x8x128xf32, #tpu.memory_space<vmem>> -> memref<1x1x128xf32, #tpu.memory_space<vmem>>
      %60 = tpu.memref_squeeze %59 : memref<1x1x128xf32, #tpu.memory_space<vmem>> -> memref<1x128xf32, #tpu.memory_space<vmem>>
      %61 = tpu.memref_slice %arg5[%21] : memref<2x!tpu.dma_semaphore, #tpu.memory_space<semaphore_mem>> -> memref<1x!tpu.dma_semaphore, #tpu.memory_space<semaphore_mem>>
      %62 = tpu.memref_squeeze %61 : memref<1x!tpu.dma_semaphore, #tpu.memory_space<semaphore_mem>> -> memref<!tpu.dma_semaphore, #tpu.memory_space<semaphore_mem>>
      tpu.enqueue_dma source(%58 : memref<1x128xf32, #tpu.memory_space<any>>) target(%60 : memref<1x128xf32, #tpu.memory_space<vmem>>) target_semaphore(%62 : memref<!tpu.dma_semaphore, #tpu.memory_space<semaphore_mem>>)
      %c5_i32 = arith.constant 5 : i32
      %63 = arith.addi %22, %c5_i32 : i32
      %64 = arith.index_cast %63 : i32 to index
      %65 = memref.load %arg1[%64] : memref<16xi32, #tpu.memory_space<smem>>
      %c0_i32_31 = arith.constant 0 : i32
      %66 = tpu.memref_slice %arg2[%65, %c0_i32_31] : memref<64x128xf32, #tpu.memory_space<any>> -> memref<1x128xf32, #tpu.memory_space<any>>
      %c5_i32_32 = arith.constant 5 : i32
      %c0_i32_33 = arith.constant 0 : i32
      %67 = tpu.memref_slice %arg4[%21, %c5_i32_32, %c0_i32_33] : memref<2x8x128xf32, #tpu.memory_space<vmem>> -> memref<1x1x128xf32, #tpu.memory_space<vmem>>
      %68 = tpu.memref_squeeze %67 : memref<1x1x128xf32, #tpu.memory_space<vmem>> -> memref<1x128xf32, #tpu.memory_space<vmem>>
      %69 = tpu.memref_slice %arg5[%21] : memref<2x!tpu.dma_semaphore, #tpu.memory_space<semaphore_mem>> -> memref<1x!tpu.dma_semaphore, #tpu.memory_space<semaphore_mem>>
      %70 = tpu.memref_squeeze %69 : memref<1x!tpu.dma_semaphore, #tpu.memory_space<semaphore_mem>> -> memref<!tpu.dma_semaphore, #tpu.memory_space<semaphore_mem>>
      tpu.enqueue_dma source(%66 : memref<1x128xf32, #tpu.memory_space<any>>) target(%68 : memref<1x128xf32, #tpu.memory_space<vmem>>) target_semaphore(%70 : memref<!tpu.dma_semaphore, #tpu.memory_space<semaphore_mem>>)
      %c6_i32 = arith.constant 6 : i32
      %71 = arith.addi %22, %c6_i32 : i32
      %72 = arith.index_cast %71 : i32 to index
      %73 = memref.load %arg1[%72] : memref<16xi32, #tpu.memory_space<smem>>
      %c0_i32_34 = arith.constant 0 : i32
      %74 = tpu.memref_slice %arg2[%73, %c0_i32_34] : memref<64x128xf32, #tpu.memory_space<any>> -> memref<1x128xf32, #tpu.memory_space<any>>
      %c6_i32_35 = arith.constant 6 : i32
      %c0_i32_36 = arith.constant 0 : i32
      %75 = tpu.memref_slice %arg4[%21, %c6_i32_35, %c0_i32_36] : memref<2x8x128xf32, #tpu.memory_space<vmem>> -> memref<1x1x128xf32, #tpu.memory_space<vmem>>
      %76 = tpu.memref_squeeze %75 : memref<1x1x128xf32, #tpu.memory_space<vmem>> -> memref<1x128xf32, #tpu.memory_space<vmem>>
      %77 = tpu.memref_slice %arg5[%21] : memref<2x!tpu.dma_semaphore, #tpu.memory_space<semaphore_mem>> -> memref<1x!tpu.dma_semaphore, #tpu.memory_space<semaphore_mem>>
      %78 = tpu.memref_squeeze %77 : memref<1x!tpu.dma_semaphore, #tpu.memory_space<semaphore_mem>> -> memref<!tpu.dma_semaphore, #tpu.memory_space<semaphore_mem>>
      tpu.enqueue_dma source(%74 : memref<1x128xf32, #tpu.memory_space<any>>) target(%76 : memref<1x128xf32, #tpu.memory_space<vmem>>) target_semaphore(%78 : memref<!tpu.dma_semaphore, #tpu.memory_space<semaphore_mem>>)
      %c7_i32 = arith.constant 7 : i32
      %79 = arith.addi %22, %c7_i32 : i32
      %80 = arith.index_cast %79 : i32 to index
      %81 = memref.load %arg1[%80] : memref<16xi32, #tpu.memory_space<smem>>
      %c0_i32_37 = arith.constant 0 : i32
      %82 = tpu.memref_slice %arg2[%81, %c0_i32_37] : memref<64x128xf32, #tpu.memory_space<any>> -> memref<1x128xf32, #tpu.memory_space<any>>
      %c7_i32_38 = arith.constant 7 : i32
      %c0_i32_39 = arith.constant 0 : i32
      %83 = tpu.memref_slice %arg4[%21, %c7_i32_38, %c0_i32_39] : memref<2x8x128xf32, #tpu.memory_space<vmem>> -> memref<1x1x128xf32, #tpu.memory_space<vmem>>
      %84 = tpu.memref_squeeze %83 : memref<1x1x128xf32, #tpu.memory_space<vmem>> -> memref<1x128xf32, #tpu.memory_space<vmem>>
      %85 = tpu.memref_slice %arg5[%21] : memref<2x!tpu.dma_semaphore, #tpu.memory_space<semaphore_mem>> -> memref<1x!tpu.dma_semaphore, #tpu.memory_space<semaphore_mem>>
      %86 = tpu.memref_squeeze %85 : memref<1x!tpu.dma_semaphore, #tpu.memory_space<semaphore_mem>> -> memref<!tpu.dma_semaphore, #tpu.memory_space<semaphore_mem>>
      tpu.enqueue_dma source(%82 : memref<1x128xf32, #tpu.memory_space<any>>) target(%84 : memref<1x128xf32, #tpu.memory_space<vmem>>) target_semaphore(%86 : memref<!tpu.dma_semaphore, #tpu.memory_space<semaphore_mem>>)
    } else {
    }
    %c1_i32_2 = arith.constant 1 : i32
    %7 = arith.andi %arg0, %c1_i32_2 : i32
    %c0_i32_3 = arith.constant 0 : i32
    %c0_i32_4 = arith.constant 0 : i32
    %8 = tpu.memref_slice %arg2[%c0_i32_3, %c0_i32_4] : memref<64x128xf32, #tpu.memory_space<any>> -> memref<8x128xf32, #tpu.memory_space<any>>
    %c0_i32_5 = arith.constant 0 : i32
    %c0_i32_6 = arith.constant 0 : i32
    %9 = tpu.memref_slice %arg4[%7, %c0_i32_5, %c0_i32_6] : memref<2x8x128xf32, #tpu.memory_space<vmem>> -> memref<1x8x128xf32, #tpu.memory_space<vmem>>
    %10 = tpu.memref_squeeze %9 : memref<1x8x128xf32, #tpu.memory_space<vmem>> -> memref<8x128xf32, #tpu.memory_space<vmem>>
    %11 = tpu.memref_slice %arg5[%7] : memref<2x!tpu.dma_semaphore, #tpu.memory_space<semaphore_mem>> -> memref<1x!tpu.dma_semaphore, #tpu.memory_space<semaphore_mem>>
    %12 = tpu.memref_squeeze %11 : memref<1x!tpu.dma_semaphore, #tpu.memory_space<semaphore_mem>> -> memref<!tpu.dma_semaphore, #tpu.memory_space<semaphore_mem>>
    tpu.wait_dma2 semaphore(%12 : memref<!tpu.dma_semaphore, #tpu.memory_space<semaphore_mem>>) src(%8 : memref<8x128xf32, #tpu.memory_space<any>>) dst(%10 : memref<8x128xf32, #tpu.memory_space<vmem>>)
    %13 = arith.index_cast %7 : i32 to index
    %c0 = arith.constant 0 : index
    %c0_7 = arith.constant 0 : index
    %14 = vector.load %arg4[%13, %c0, %c0_7] : memref<2x8x128xf32, #tpu.memory_space<vmem>>, vector<1x8x128xf32>
    %15 = vector.shape_cast %14 : vector<1x8x128xf32> to vector<8x128xf32>
    %cst = arith.constant 11.3137083 : f32
    %16 = vector.broadcast %cst : f32 to vector<8x128xf32>
    %17 = arith.mulf %15, %16 : vector<8x128xf32>
    %c0_8 = arith.constant 0 : index
    %c0_9 = arith.constant 0 : index
    %18 = vector.load %arg3[%c0_8, %c0_9] : memref<8x128xf32, #tpu.memory_space<vmem>>, vector<8x128xf32>
    tpu.vector_store %arg3[%c0_8, %c0_9], %17 {strides = array<i32>} : memref<8x128xf32, #tpu.memory_space<vmem>>, vector<8x128xf32>,
    return
  }
  func.func @transform_1(%arg0: i32, %arg1: memref<16xi32, #tpu.memory_space<smem>>) -> (i32, i32) {
    %c0_i32 = arith.constant 0 : i32
    %c0_i32_0 = arith.constant 0 : i32
    return %arg0, %c0_i32 : i32, i32
  }
}

</mosaic_0001>

<llo_original>
// kernel: tpu_custom_call.1
$region0: #{tpu_custom_call.1}
  #allocation0 [shape = 'u32[]', space=smem, size = 0x4, offset = 0x4, fixed_abs, tag = 'smem constant byte address 0x4 - core index']
  #allocation1 [shape = 'u32[72,128]{1,0:T(1,128)}', space=vmem, size = 0x9000, scoped, tag = 'internal scratch']
  #allocation2 [shape = 'f32[2,8,128]{2,1,0:T(8,128)}', space=vmem, size = 0x2000, scoped, tag = 'scratch operand']
  #allocation3 [shape = 's32[2]{0}', space=sflag, size = 0x8, scoped, tag = 'scratch operand']
  #allocation4 [shape = 's32[1]{0}', space=sflag, size = 0x4, scoped, tag = 'scoped memory for tpu_custom_call.1']
  #allocation5 [shape = 'u8[512]{0}', space=smem, size = 0x200, scoped, tag = 'prefetched SMEM operand 0']
  #allocation8 [shape = 's32[]', space=sflag, size = 0x4, offset = 0, fixed_abs, tag = 'sflag constant byte address 0x0 - dummy sync flag']
  #allocation9 [shape = 's32[]', space=sflag, size = 0x4, offset = 0, fixed_abs, tag = 'sflag constant byte address 0x0 - dummy sync flag']
  #allocation10 [shape = 'u32[]', space=smem, size = 0x4, offset = 0x44, fixed_abs, tag = 'smem constant byte address 0x44 - assertion arg 0']
  #allocation11 [shape = 'u32[]', space=smem, size = 0x4, offset = 0x48, fixed_abs, tag = 'smem constant byte address 0x48 - assertion arg 1']
  #allocation12 [shape = 's32[]', space=sflag, size = 0x4, offset = 0, fixed_abs, tag = 'sflag constant byte address 0x0 - dummy sync flag']
  #allocation13 [shape = 's32[]', space=sflag, size = 0x4, offset = 0, fixed_abs, tag = 'sflag constant byte address 0x0 - dummy sync flag']
  #allocation14 [shape = 's32[]', space=sflag, size = 0x4, offset = 0, fixed_abs, tag = 'sflag constant byte address 0x0 - dummy sync flag']
  #allocation15 [shape = 's32[]', space=sflag, size = 0x4, offset = 0, fixed_abs, tag = 'sflag constant byte address 0x0 - dummy sync flag']
  #allocation16 [shape = 's32[]', space=sflag, size = 0x4, offset = 0, fixed_abs, tag = 'sflag constant byte address 0x0 - dummy sync flag']
  #allocation17 [shape = 's32[]', space=sflag, size = 0x4, offset = 0, fixed_abs, tag = 'sflag constant byte address 0x0 - dummy sync flag']
  #allocation18 [shape = 's32[]', space=sflag, size = 0x4, offset = 0, fixed_abs, tag = 'sflag constant byte address 0x0 - dummy sync flag']
  #allocation19 [shape = 's32[]', space=sflag, size = 0x4, offset = 0, fixed_abs, tag = 'sflag constant byte address 0x0 - dummy sync flag']
  #allocation20 [shape = 's32[]', space=sflag, size = 0x4, offset = 0, fixed_abs, tag = 'sflag constant byte address 0x0 - dummy sync flag']
  #allocation21 [shape = 's32[]', space=sflag, size = 0x4, offset = 0, fixed_abs, tag = 'sflag constant byte address 0x0 - dummy sync flag']
  #allocation22 [shape = 's32[]', space=sflag, size = 0x4, offset = 0, fixed_abs, tag = 'sflag constant byte address 0x0 - dummy sync flag']
  #allocation23 [shape = 's32[]', space=sflag, size = 0x4, offset = 0, fixed_abs, tag = 'sflag constant byte address 0x0 - dummy sync flag']
  #allocation24 [shape = 's32[]', space=sflag, size = 0x4, offset = 0, fixed_abs, tag = 'sflag constant byte address 0x0 - dummy sync flag']
  #allocation25 [shape = 's32[]', space=sflag, size = 0x4, offset = 0, fixed_abs, tag = 'sflag constant byte address 0x0 - dummy sync flag']
  #allocation26 [shape = 's32[]', space=sflag, size = 0x4, offset = 0, fixed_abs, tag = 'sflag constant byte address 0x0 - dummy sync flag']
  #allocation27 [shape = 's32[]', space=sflag, size = 0x4, offset = 0, fixed_abs, tag = 'sflag constant byte address 0x0 - dummy sync flag']
  #allocation28 [shape = 's32[]', space=sflag, size = 0x4, offset = 0, fixed_abs, tag = 'sflag constant byte address 0x0 - dummy sync flag']
  #allocation29 [shape = 's32[]', space=sflag, size = 0x4, offset = 0, fixed_abs, tag = 'sflag constant byte address 0x0 - dummy sync flag']
  #allocation30 [shape = 's32[]', space=sflag, size = 0x4, offset = 0, fixed_abs, tag = 'sflag constant byte address 0x0 - dummy sync flag']
  #allocation31 [shape = 's32[]', space=sflag, size = 0x4, offset = 0, fixed_abs, tag = 'sflag constant byte address 0x0 - dummy sync flag']
  #allocation32 [shape = 's32[]', space=sflag, size = 0x4, offset = 0, fixed_abs, tag = 'sflag constant byte address 0x0 - dummy sync flag']
  #allocation33 [shape = 's32[]', space=sflag, size = 0x4, offset = 0, fixed_abs, tag = 'sflag constant byte address 0x0 - dummy sync flag']
  #allocation34 [shape = 's32[]', space=sflag, size = 0x4, offset = 0, fixed_abs, tag = 'sflag constant byte address 0x0 - dummy sync flag']
  #allocation35 [shape = 's32[]', space=sflag, size = 0x4, offset = 0, fixed_abs, tag = 'sflag constant byte address 0x0 - dummy sync flag']
  #allocation36 [shape = 's32[]', space=sflag, size = 0x4, offset = 0, fixed_abs, tag = 'sflag constant byte address 0x0 - dummy sync flag']
  #allocation37 [shape = 's32[]', space=sflag, size = 0x4, offset = 0, fixed_abs, tag = 'sflag constant byte address 0x0 - dummy sync flag']
  #allocation38 [shape = 's32[]', space=sflag, size = 0x4, offset = 0, fixed_abs, tag = 'sflag constant byte address 0x0 - dummy sync flag']
  #allocation39 [shape = 's32[]', space=sflag, size = 0x4, offset = 0, fixed_abs, tag = 'sflag constant byte address 0x0 - dummy sync flag']
  #allocation40 [shape = 's32[]', space=sflag, size = 0x4, offset = 0, fixed_abs, tag = 'sflag constant byte address 0x0 - dummy sync flag']
  #allocation41 [shape = 's32[]', space=sflag, size = 0x4, offset = 0, fixed_abs, tag = 'sflag constant byte address 0x0 - dummy sync flag']
  %s0 = inlined_call_operand.hbm [shape: s32[16], index: 0, kind: input, shape index: {}]
  %s1 = inlined_call_operand.hbm [shape: f32[64,128], index: 1, kind: input, shape index: {}]
  %s2 = inlined_call_operand.hbm [shape: f32[16,128], index: 2, kind: output, shape index: {}]
  %s3 = sld [smem:[#allocation0]]
  $region97: #{tpu_custom_call.1} parent=0
    _
  %s5 = ssub.s32 1, %s3
  %s6 = scalar_select 0, %s5, %s3
  %s8 = sshll.u32 %s0, 4
  %s9 = int_to_ptr.hbm [resolvable:$true] %s8
  %11 = dma.hbm_to_smem %s9, 16, [#allocation5], [#allocation4]
  %13 = dma.done [#allocation4], 16
  %14 = sfence
  $region1: #{tpu_custom_call.1} parent=0
    #allocation6 [shape = 'u8[8192]{0}', space=vmem, size = 0x2000, scoped, tag = 'output window, operand 0']
    #allocation7 [shape = 's32[2]{0}', space=sflag, size = 0x8, scoped, tag = 'scoped memory for tpu_custom_call.1']
    %15 = vsyncpa [#allocation7], 0
    %s16 = scalar_lea.sflag [#allocation7], 1
    %17 = vsyncpa %s16, 0
    loop: start=0, step=1, limit=3
    $region2: #{tpu_custom_call.1} parent=1 // loop_pre_header
      _
    $region3: #{tpu_custom_call.1} parent=1 // loop_header
      %s19 = sphi 0, %s23
      %p20 = scmp.ge.s32.totalorder %s19, 3
      %s28 = sphi 0, %s30
      %s31 = sphi 0, %s28
      %s41 = sphi 0, %s31
    $region4: #{tpu_custom_call.1} parent=1 // loop_header_branch
      %22 = sbr.rel (%p20) target = $region8
    $region5: #{tpu_custom_call.1} parent=1 // loop_body
      %s24 = ssub.s32 %s19, 1
      %s25 = sadd.s32 %s19, 1
      %s26 = ssub.s32 %s19, %s25
      %p27 = scmp.eq.s32.totalorder %s26, 0
      %s29 = sadd.s32 %s28, 1
      %s30 = scalar_select %p27, %s28, %s29
      %p32 = pneg %p27
      %p33 = scmp.eq.s32.totalorder %s19, 1
      %p34 = por %p32, %p33
      %p35 = scmp.ne.s32.totalorder %s28, %s31
      %p36 = scmp.eq.s32.totalorder %s19, 0
      %p37 = por %p35, %p36
      %p38 = scmp.ne.s32.totalorder %s28, %s31
      %p39 = scmp.eq.s32.totalorder %s24, 1
      %p40 = por %p38, %p39
      %p42 = scmp.ne.s32.totalorder %s31, %s41
      %p43 = scmp.eq.s32.totalorder %s24, 0
      %p44 = por %p42, %p43
      %p45 = scmp.lt.s32.totalorder %s19, 2
      // Predicated region
      $region9: #{tpu_custom_call.1} parent=5 // pred_check
        %p46 = pneg %p45
      $region10: #{tpu_custom_call.1} parent=5 // pred_check_branch
        %48 = sbr.rel (%p46) target = $region12
      $region11: #{tpu_custom_call.1} parent=5 // pred_region
        %p49 = pneg %p37
        %p50 = pneg %p34
        %s51 = sand.u32 %s28, 1
        %s52 = scalar_lea.sflag [#allocation7], %s51
        %s53 = sand.u32 %s28, 1
        %s54 = smul.addr %s53, 8
        %s55 = scalar_lea.vmem [#allocation6], %s54
        %p56 = scmp.eq.s32.totalorder %s19, 0
        // Predicated region
        $region13: #{tpu_custom_call.1} parent=11 // pred_check
          %p57 = pneg %p56
        $region14: #{tpu_custom_call.1} parent=11 // pred_check_branch
          %59 = sbr.rel (%p57) target = $region16
        $region15: #{tpu_custom_call.1} parent=11 // pred_region
          %s60 = sld [smem:[#allocation5]]
          %s61 = scalar_lea.hbm %s1, %s60
          // Predicated region
          $region17: #{tpu_custom_call.1} parent=15 // pred_check
            _
          $region18: #{tpu_custom_call.1} parent=15 // pred_check_branch
            %63 = sbr.rel target = $region20
          $region19: #{tpu_custom_call.1} parent=15 // pred_region
            %64 = sst [smem:[#allocation10]] [#allocation9]
            %65 = sst [smem:[#allocation11]] [#allocation8]
          $region20: #{tpu_custom_call.1} parent=15 // pred_fallthru
            _
          %67 = shalt.err (0)
          %s69 = sshll.u32 %s61, 4
          %s70 = int_to_ptr.hbm [resolvable:$true] %s69
          %s71 = sshll.u32 [#allocation2], 4
          %s72 = int_to_ptr.vmem [resolvable:$true] %s71
          %74 = dma.hbm_to_vmem [thread:$0]  %s70, 16, %s72, [#allocation3]
          %s75 = sld [smem:[#allocation5 + $0x1]]
          %s76 = scalar_lea.hbm %s1, %s75
          %s77 = scalar_lea.vmem [#allocation2], 1
          // Predicated region
          $region21: #{tpu_custom_call.1} parent=15 // pred_check
            _
          $region22: #{tpu_custom_call.1} parent=15 // pred_check_branch
            %79 = sbr.rel target = $region24
          $region23: #{tpu_custom_call.1} parent=15 // pred_region
            %80 = sst [smem:[#allocation10]] [#allocation13]
            %81 = sst [smem:[#allocation11]] [#allocation12]
          $region24: #{tpu_custom_call.1} parent=15 // pred_fallthru
            _
          %83 = shalt.err (0)
          %s85 = sshll.u32 %s76, 4
          %s86 = int_to_ptr.hbm [resolvable:$true] %s85
          %s87 = sshll.u32 %s77, 4
          %s88 = int_to_ptr.vmem [resolvable:$true] %s87
          %90 = dma.hbm_to_vmem [thread:$0]  %s86, 16, %s88, [#allocation3]
          %s91 = sld [smem:[#allocation5 + $0x2]]
          %s92 = scalar_lea.hbm %s1, %s91
          %s93 = scalar_lea.vmem [#allocation2], 2
          // Predicated region
          $region25: #{tpu_custom_call.1} parent=15 // pred_check
            _
          $region26: #{tpu_custom_call.1} parent=15 // pred_check_branch
            %95 = sbr.rel target = $region28
          $region27: #{tpu_custom_call.1} parent=15 // pred_region
            %96 = sst [smem:[#allocation10]] [#allocation15]
            %97 = sst [smem:[#allocation11]] [#allocation14]
          $region28: #{tpu_custom_call.1} parent=15 // pred_fallthru
            _
          %99 = shalt.err (0)
          %s101 = sshll.u32 %s92, 4
          %s102 = int_to_ptr.hbm [resolvable:$true] %s101
          %s103 = sshll.u32 %s93, 4
          %s104 = int_to_ptr.vmem [resolvable:$true] %s103
          %106 = dma.hbm_to_vmem [thread:$0]  %s102, 16, %s104, [#allocation3]
          %s107 = sld [smem:[#allocation5 + $0x3]]
          %s108 = scalar_lea.hbm %s1, %s107
          %s109 = scalar_lea.vmem [#allocation2], 3
          // Predicated region
          $region29: #{tpu_custom_call.1} parent=15 // pred_check
            _
          $region30: #{tpu_custom_call.1} parent=15 // pred_check_branch
            %111 = sbr.rel target = $region32
          $region31: #{tpu_custom_call.1} parent=15 // pred_region
            %112 = sst [smem:[#allocation10]] [#allocation17]
            %113 = sst [smem:[#allocation11]] [#allocation16]
          $region32: #{tpu_custom_call.1} parent=15 // pred_fallthru
            _
          %115 = shalt.err (0)
          %s117 = sshll.u32 %s108, 4
          %s118 = int_to_ptr.hbm [resolvable:$true] %s117
          %s119 = sshll.u32 %s109, 4
          %s120 = int_to_ptr.vmem [resolvable:$true] %s119
          %122 = dma.hbm_to_vmem [thread:$0]  %s118, 16, %s120, [#allocation3]
          %s123 = sld [smem:[#allocation5 + $0x4]]
          %s124 = scalar_lea.hbm %s1, %s123
          %s125 = scalar_lea.vmem [#allocation2], 4
          // Predicated region
          $region33: #{tpu_custom_call.1} parent=15 // pred_check
            _
          $region34: #{tpu_custom_call.1} parent=15 // pred_check_branch
            %127 = sbr.rel target = $region36
          $region35: #{tpu_custom_call.1} parent=15 // pred_region
            %128 = sst [smem:[#allocation10]] [#allocation19]
            %129 = sst [smem:[#allocation11]] [#allocation18]
          $region36: #{tpu_custom_call.1} parent=15 // pred_fallthru
            _
          %131 = shalt.err (0)
          %s133 = sshll.u32 %s124, 4
          %s134 = int_to_ptr.hbm [resolvable:$true] %s133
          %s135 = sshll.u32 %s125, 4
          %s136 = int_to_ptr.vmem [resolvable:$true] %s135
          %138 = dma.hbm_to_vmem [thread:$0]  %s134, 16, %s136, [#allocation3]
          %s139 = sld [smem:[#allocation5 + $0x5]]
          %s140 = scalar_lea.hbm %s1, %s139
          %s141 = scalar_lea.vmem [#allocation2], 5
          // Predicated region
          $region37: #{tpu_custom_call.1} parent=15 // pred_check
            _
          $region38: #{tpu_custom_call.1} parent=15 // pred_check_branch
            %143 = sbr.rel target = $region40
          $region39: #{tpu_custom_call.1} parent=15 // pred_region
            %144 = sst [smem:[#allocation10]] [#allocation21]
            %145 = sst [smem:[#allocation11]] [#allocation20]
          $region40: #{tpu_custom_call.1} parent=15 // pred_fallthru
            _
          %147 = shalt.err (0)
          %s149 = sshll.u32 %s140, 4
          %s150 = int_to_ptr.hbm [resolvable:$true] %s149
          %s151 = sshll.u32 %s141, 4
          %s152 = int_to_ptr.vmem [resolvable:$true] %s151
          %154 = dma.hbm_to_vmem [thread:$0]  %s150, 16, %s152, [#allocation3]
          %s155 = sld [smem:[#allocation5 + $0x6]]
          %s156 = scalar_lea.hbm %s1, %s155
          %s157 = scalar_lea.vmem [#allocation2], 6
          // Predicated region
          $region41: #{tpu_custom_call.1} parent=15 // pred_check
            _
          $region42: #{tpu_custom_call.1} parent=15 // pred_check_branch
            %159 = sbr.rel target = $region44
          $region43: #{tpu_custom_call.1} parent=15 // pred_region
            %160 = sst [smem:[#allocation10]] [#allocation23]
            %161 = sst [smem:[#allocation11]] [#allocation22]
          $region44: #{tpu_custom_call.1} parent=15 // pred_fallthru
            _
          %163 = shalt.err (0)
          %s165 = sshll.u32 %s156, 4
          %s166 = int_to_ptr.hbm [resolvable:$true] %s165
          %s167 = sshll.u32 %s157, 4
          %s168 = int_to_ptr.vmem [resolvable:$true] %s167
          %170 = dma.hbm_to_vmem [thread:$0]  %s166, 16, %s168, [#allocation3]
          %s171 = sld [smem:[#allocation5 + $0x7]]
          %s172 = scalar_lea.hbm %s1, %s171
          %s173 = scalar_lea.vmem [#allocation2], 7
          // Predicated region
          $region45: #{tpu_custom_call.1} parent=15 // pred_check
            _
          $region46: #{tpu_custom_call.1} parent=15 // pred_check_branch
            %175 = sbr.rel target = $region48
          $region47: #{tpu_custom_call.1} parent=15 // pred_region
            %176 = sst [smem:[#allocation10]] [#allocation25]
            %177 = sst [smem:[#allocation11]] [#allocation24]
          $region48: #{tpu_custom_call.1} parent=15 // pred_fallthru
            _
          %179 = shalt.err (0)
          %s181 = sshll.u32 %s172, 4
          %s182 = int_to_ptr.hbm [resolvable:$true] %s181
          %s183 = sshll.u32 %s173, 4
          %s184 = int_to_ptr.vmem [resolvable:$true] %s183
          %186 = dma.hbm_to_vmem [thread:$0]  %s182, 16, %s184, [#allocation3]
        $region16: #{tpu_custom_call.1} parent=11 // pred_fallthru
          _
        %s187 = sadd.s32 %s19, 1
        %p188 = scmp.lt.s32.totalorder %s187, 2
        // Predicated region
        $region49: #{tpu_custom_call.1} parent=11 // pred_check
          %p189 = pneg %p188
        $region50: #{tpu_custom_call.1} parent=11 // pred_check_branch
          %191 = sbr.rel (%p189) target = $region52
        $region51: #{tpu_custom_call.1} parent=11 // pred_region
          %s192 = sand.u32 %s187, 1
          %s193 = smul.u32 %s187, 8
          %s194 = sld [smem:[#allocation5 + %s193]]
          %s195 = scalar_lea.hbm %s1, %s194
          %s196 = smul.u32 %s192, 8
          %s197 = scalar_lea.vmem [#allocation2], %s196
          %s198 = scalar_lea.sflag [#allocation3], %s192
          // Predicated region
          $region53: #{tpu_custom_call.1} parent=51 // pred_check
            _
          $region54: #{tpu_custom_call.1} parent=51 // pred_check_branch
            %200 = sbr.rel target = $region56
          $region55: #{tpu_custom_call.1} parent=51 // pred_region
            %201 = sst [smem:[#allocation10]] [#allocation27]
            %202 = sst [smem:[#allocation11]] [#allocation26]
          $region56: #{tpu_custom_call.1} parent=51 // pred_fallthru
            _
          %204 = shalt.err (0)
          %s206 = sshll.u32 %s195, 4
          %s207 = int_to_ptr.hbm [resolvable:$true] %s206
          %s208 = sshll.u32 %s197, 4
          %s209 = int_to_ptr.vmem [resolvable:$true] %s208
          %211 = dma.hbm_to_vmem [thread:$0]  %s207, 16, %s209, %s198
          %s212 = sadd.s32 %s193, 1
          %s213 = sld [smem:[#allocation5 + %s212]]
          %s214 = scalar_lea.hbm %s1, %s213
          %s215 = sadd.s32 1, %s196
          %s216 = scalar_lea.vmem [#allocation2], %s215
          // Predicated region
          $region57: #{tpu_custom_call.1} parent=51 // pred_check
            _
          $region58: #{tpu_custom_call.1} parent=51 // pred_check_branch
            %218 = sbr.rel target = $region60
          $region59: #{tpu_custom_call.1} parent=51 // pred_region
            %219 = sst [smem:[#allocation10]] [#allocation29]
            %220 = sst [smem:[#allocation11]] [#allocation28]
          $region60: #{tpu_custom_call.1} parent=51 // pred_fallthru
            _
          %222 = shalt.err (0)
          %s224 = sshll.u32 %s214, 4
          %s225 = int_to_ptr.hbm [resolvable:$true] %s224
          %s226 = sshll.u32 %s216, 4
          %s227 = int_to_ptr.vmem [resolvable:$true] %s226
          %229 = dma.hbm_to_vmem [thread:$0]  %s225, 16, %s227, %s198
          %s230 = sadd.s32 %s193, 2
          %s231 = sld [smem:[#allocation5 + %s230]]
          %s232 = scalar_lea.hbm %s1, %s231
          %s233 = sadd.s32 2, %s196
          %s234 = scalar_lea.vmem [#allocation2], %s233
          // Predicated region
          $region61: #{tpu_custom_call.1} parent=51 // pred_check
            _
          $region62: #{tpu_custom_call.1} parent=51 // pred_check_branch
            %236 = sbr.rel target = $region64
          $region63: #{tpu_custom_call.1} parent=51 // pred_region
            %237 = sst [smem:[#allocation10]] [#allocation31]
            %238 = sst [smem:[#allocation11]] [#allocation30]
          $region64: #{tpu_custom_call.1} parent=51 // pred_fallthru
            _
          %240 = shalt.err (0)
          %s242 = sshll.u32 %s232, 4
          %s243 = int_to_ptr.hbm [resolvable:$true] %s242
          %s244 = sshll.u32 %s234, 4
          %s245 = int_to_ptr.vmem [resolvable:$true] %s244
          %247 = dma.hbm_to_vmem [thread:$0]  %s243, 16, %s245, %s198
          %s248 = sadd.s32 %s193, 3
          %s249 = sld [smem:[#allocation5 + %s248]]
          %s250 = scalar_lea.hbm %s1, %s249
          %s251 = sadd.s32 3, %s196
          %s252 = scalar_lea.vmem [#allocation2], %s251
          // Predicated region
          $region65: #{tpu_custom_call.1} parent=51 // pred_check
            _
          $region66: #{tpu_custom_call.1} parent=51 // pred_check_branch
            %254 = sbr.rel target = $region68
          $region67: #{tpu_custom_call.1} parent=51 // pred_region
            %255 = sst [smem:[#allocation10]] [#allocation33]
            %256 = sst [smem:[#allocation11]] [#allocation32]
          $region68: #{tpu_custom_call.1} parent=51 // pred_fallthru
            _
          %258 = shalt.err (0)
          %s260 = sshll.u32 %s250, 4
          %s261 = int_to_ptr.hbm [resolvable:$true] %s260
          %s262 = sshll.u32 %s252, 4
          %s263 = int_to_ptr.vmem [resolvable:$true] %s262
          %265 = dma.hbm_to_vmem [thread:$0]  %s261, 16, %s263, %s198
          %s266 = sadd.s32 %s193, 4
          %s267 = sld [smem:[#allocation5 + %s266]]
          %s268 = scalar_lea.hbm %s1, %s267
          %s269 = sadd.s32 4, %s196
          %s270 = scalar_lea.vmem [#allocation2], %s269
          // Predicated region
          $region69: #{tpu_custom_call.1} parent=51 // pred_check
            _
          $region70: #{tpu_custom_call.1} parent=51 // pred_check_branch
            %272 = sbr.rel target = $region72
          $region71: #{tpu_custom_call.1} parent=51 // pred_region
            %273 = sst [smem:[#allocation10]] [#allocation35]
            %274 = sst [smem:[#allocation11]] [#allocation34]
          $region72: #{tpu_custom_call.1} parent=51 // pred_fallthru
            _
          %276 = shalt.err (0)
          %s278 = sshll.u32 %s268, 4
          %s279 = int_to_ptr.hbm [resolvable:$true] %s278
          %s280 = sshll.u32 %s270, 4
          %s281 = int_to_ptr.vmem [resolvable:$true] %s280
          %283 = dma.hbm_to_vmem [thread:$0]  %s279, 16, %s281, %s198
          %s284 = sadd.s32 %s193, 5
          %s285 = sld [smem:[#allocation5 + %s284]]
          %s286 = scalar_lea.hbm %s1, %s285
          %s287 = sadd.s32 5, %s196
          %s288 = scalar_lea.vmem [#allocation2], %s287
          // Predicated region
          $region73: #{tpu_custom_call.1} parent=51 // pred_check
            _
          $region74: #{tpu_custom_call.1} parent=51 // pred_check_branch
            %290 = sbr.rel target = $region76
          $region75: #{tpu_custom_call.1} parent=51 // pred_region
            %291 = sst [smem:[#allocation10]] [#allocation37]
            %292 = sst [smem:[#allocation11]] [#allocation36]
          $region76: #{tpu_custom_call.1} parent=51 // pred_fallthru
            _
          %294 = shalt.err (0)
          %s296 = sshll.u32 %s286, 4
          %s297 = int_to_ptr.hbm [resolvable:$true] %s296
          %s298 = sshll.u32 %s288, 4
          %s299 = int_to_ptr.vmem [resolvable:$true] %s298
          %301 = dma.hbm_to_vmem [thread:$0]  %s297, 16, %s299, %s198
          %s302 = sadd.s32 %s193, 6
          %s303 = sld [smem:[#allocation5 + %s302]]
          %s304 = scalar_lea.hbm %s1, %s303
          %s305 = sadd.s32 6, %s196
          %s306 = scalar_lea.vmem [#allocation2], %s305
          // Predicated region
          $region77: #{tpu_custom_call.1} parent=51 // pred_check
            _
          $region78: #{tpu_custom_call.1} parent=51 // pred_check_branch
            %308 = sbr.rel target = $region80
          $region79: #{tpu_custom_call.1} parent=51 // pred_region
            %309 = sst [smem:[#allocation10]] [#allocation39]
            %310 = sst [smem:[#allocation11]] [#allocation38]
          $region80: #{tpu_custom_call.1} parent=51 // pred_fallthru
            _
          %312 = shalt.err (0)
          %s314 = sshll.u32 %s304, 4
          %s315 = int_to_ptr.hbm [resolvable:$true] %s314
          %s316 = sshll.u32 %s306, 4
          %s317 = int_to_ptr.vmem [resolvable:$true] %s316
          %319 = dma.hbm_to_vmem [thread:$0]  %s315, 16, %s317, %s198
          %s320 = sadd.s32 %s193, 7
          %s321 = sld [smem:[#allocation5 + %s320]]
          %s322 = scalar_lea.hbm %s1, %s321
          %s323 = sadd.s32 7, %s196
          %s324 = scalar_lea.vmem [#allocation2], %s323
          // Predicated region
          $region81: #{tpu_custom_call.1} parent=51 // pred_check
            _
          $region82: #{tpu_custom_call.1} parent=51 // pred_check_branch
            %326 = sbr.rel target = $region84
          $region83: #{tpu_custom_call.1} parent=51 // pred_region
            %327 = sst [smem:[#allocation10]] [#allocation41]
            %328 = sst [smem:[#allocation11]] [#allocation40]
          $region84: #{tpu_custom_call.1} parent=51 // pred_fallthru
            _
          %330 = shalt.err (0)
          %s332 = sshll.u32 %s322, 4
          %s333 = int_to_ptr.hbm [resolvable:$true] %s332
          %s334 = sshll.u32 %s324, 4
          %s335 = int_to_ptr.vmem [resolvable:$true] %s334
          %337 = dma.hbm_to_vmem [thread:$0]  %s333, 16, %s335, %s198
        $region52: #{tpu_custom_call.1} parent=11 // pred_fallthru
          _
        %s338 = sand.u32 %s19, 1
        %s339 = smul.u32 %s338, 8
        %s340 = scalar_lea.vmem [#allocation2], %s339
        %s341 = scalar_lea.sflag [#allocation3], %s338
        %s342 = smul.u32 8, 1
        %s343 = sshll.u32 %s342, 4
        %344 = dma.done %s341, %s343
        %v345 = vld [vmem:[%s340] sm:$0xff]
        %v346 = vmul.f32 %v345, 11.313708
        %347 = vst [vmem:[%s55] sm:$0xff] %v346
        %s348 = sand.u32 %s28, 1
        %s349 = scalar_lea.sflag [#allocation7], %s348
        %s350 = sand.u32 %s28, 1
        %s351 = smul.addr %s350, 8
        %s352 = scalar_lea.vmem [#allocation6], %s351
        // Predicated region
        $region85: #{tpu_custom_call.1} parent=11 // pred_check
          %p353 = pneg %p34
        $region86: #{tpu_custom_call.1} parent=11 // pred_check_branch
          %355 = sbr.rel (%p353) target = $region88
        $region87: #{tpu_custom_call.1} parent=11 // pred_region
          %357 = vsyncadd %s349, 0
          %s358 = smul.addr %s19, 8
          %s359 = scalar_lea.hbm %s2, %s358
          %s361 = sshll.u32 %s352, 4
          %s362 = int_to_ptr.vmem [resolvable:$true] %s361
          %s363 = sshll.u32 %s359, 4
          %s364 = int_to_ptr.hbm [resolvable:$true] %s363
          %366 = dma.vmem_to_hbm [thread:$0]  %s362, 128, %s364, %s349
        $region88: #{tpu_custom_call.1} parent=11 // pred_fallthru
          _
      $region12: #{tpu_custom_call.1} parent=5 // pred_fallthru
        _
      %p367 = scmp.le.s32.totalorder 1, %s19
      // Predicated region
      $region89: #{tpu_custom_call.1} parent=5 // pred_check
        %p368 = pneg %p367
      $region90: #{tpu_custom_call.1} parent=5 // pred_check_branch
        %370 = sbr.rel (%p368) target = $region92
      $region91: #{tpu_custom_call.1} parent=5 // pred_region
        %s371 = ssub.s32 %s19, 1
        // Predicated region
        $region93: #{tpu_custom_call.1} parent=91 // pred_check
          %p372 = pneg %p40
        $region94: #{tpu_custom_call.1} parent=91 // pred_check_branch
          %374 = sbr.rel (%p372) target = $region96
        $region95: #{tpu_custom_call.1} parent=91 // pred_region
          %s375 = sand.u32 %s31, 1
          %s376 = scalar_lea.sflag [#allocation7], %s375
          %s377 = sand.u32 %s31, 1
          %s378 = smul.addr %s377, 8
          %s379 = scalar_lea.vmem [#allocation6], %s378
          %381 = dma.done %s376, 128
        $region96: #{tpu_custom_call.1} parent=91 // pred_fallthru
          _
      $region92: #{tpu_custom_call.1} parent=5 // pred_fallthru
        _
    $region6: #{tpu_custom_call.1} parent=1 // loop_footer
      %s23 = sadd.s32 1, %s19
    $region7: #{tpu_custom_call.1} parent=1 // loop_footer_branch
      %18 = sbr.rel target = $region3
    $region8: #{tpu_custom_call.1} parent=1 // loop_exit
      _
    %382 = vsyncpa [#allocation7], 1
    %s383 = scalar_lea.sflag [#allocation7], 1
    %384 = vsyncpa %s383, 1
  %385 = vsyncmov [#allocation3]
  %s386 = vpop.sfrf %385
  %p387 = scmp.eq.s32.totalorder %s386, 0
  %p388 = pneg %p387
  %390 = shalt.err (%p388)
  %s391 = scalar_lea.sflag [#allocation3], 1
  %392 = vsyncmov %s391
  %s393 = vpop.sfrf %392
  %p394 = scmp.eq.s32.totalorder %s393, 0
  %p395 = pneg %p394
  %397 = shalt.err (%p395)

</llo_original>
